<compile_context>
chip_gen: v5e
topology: v5e:2x2
jax: 0.10.0
libtpu: 0.0.40
codegen_flags: <defaults>
</compile_context>

<pallas_src>
import jax
import jax.numpy as jnp
from jax.experimental import pallas as pl
from jax.experimental.pallas import tpu as pltpu

_LANES = 512          # lane-dense last dim (multiple of 128)
_TILE_ROWS = 1024     # rows per block: (1024, 512) f32 = 2 MiB per buffer
_MIN_PALLAS_ELEMENTS = 1 << 15  # below this, plain astype (fused by XLA) wins


def _cast_to_int_kernel(x_ref, o_ref):
    # Elementwise cast; float -> int32 truncates toward zero, matching
    # torch.Tensor.to(dtype=torch.int) for in-range finite values.
    o_ref[...] = x_ref[...].astype(jnp.int32)


def _pallas_cast_to_int32(x):
    """Cast any-shape array to int32 via a lane-dense, tiled Pallas kernel."""
    orig_shape = x.shape
    n = x.size

    # Flatten and pad so the slab is [rows, _LANES] with rows a multiple of 8.
    chunk = 8 * _LANES
    padded_n = ((n + chunk - 1) // chunk) * chunk
    flat = x.reshape(-1)
    if padded_n != n:
        flat = jnp.pad(flat, (0, padded_n - n))
    rows = padded_n // _LANES
    slab = flat.reshape(rows, _LANES)

    # Tile over rows; block last-two dims are (multiple of 8, multiple of 128).
    tile_rows = min(_TILE_ROWS, rows)
    grid = (pl.cdiv(rows, tile_rows),)

    in_bytes = x.dtype.itemsize * padded_n
    out_bytes = 4 * padded_n

    out_slab = pl.pallas_call(
        _cast_to_int_kernel,
        out_shape=jax.ShapeDtypeStruct((rows, _LANES), jnp.int32),
        grid=grid,
        in_specs=[pl.BlockSpec((tile_rows, _LANES), lambda i: (i, 0))],
        out_specs=pl.BlockSpec((tile_rows, _LANES), lambda i: (i, 0)),
        compiler_params=pltpu.CompilerParams(
            dimension_semantics=("parallel",),
        ),
        cost_estimate=pl.CostEstimate(
            flops=0,
            transcendentals=0,
            bytes_accessed=in_bytes + out_bytes,
        ),
    )(slab)

    # Drop the pad region and restore the original shape.
    return out_slab.reshape(-1)[:n].reshape(orig_shape)


def date_preprocessing(v, *, min_pallas_elements=_MIN_PALLAS_ELEMENTS):
    """JAX/Pallas equivalent of _DatePreprocessing.forward.

    Accepts either a single array [B, D] or a list of arrays [D] (stacked to
    [B, D]); returns an int32 array of the same shape.
    """
    if isinstance(v, (list, tuple)):
        v = jnp.stack([jnp.asarray(t) for t in v])  # mirrors torch.stack
    if not isinstance(v, (jnp.ndarray, jax.Array)):
        raise ValueError(f"Unsupported input: {v}")

    x = jnp.asarray(v)
    if x.size < min_pallas_elements:
        # Tiny inputs: custom-call launch overhead dwarfs the work; let XLA
        # fuse the cast into neighbors instead.
        return x.astype(jnp.int32)
    return _pallas_cast_to_int32(x)


if __name__ == "__main__":
    key = jax.random.PRNGKey(0)
    B, D = 8, 9  # D = Ludwig DATE_VECTOR_LENGTH

    # Case 1: small batched float date vectors (incl. negatives to check
    # truncation toward zero); force the Pallas path so the kernel runs.
    x = jax.random.uniform(key, (B, D), dtype=jnp.float32) * 100.0 - 50.0
    y = jax.block_until_ready(date_preprocessing(x, min_pallas_elements=0))
    assert y.dtype == jnp.int32 and y.shape == (B, D)
    assert jnp.array_equal(y, x.astype(jnp.int32))

    # Case 2: a list of per-example date vectors (stacked in the wrapper),
    # small enough that the fused-astype fallback is used.
    keys = jax.random.split(key, B)
    vecs = [jax.random.randint(k, (D,), 0, 3000).astype(jnp.float32) for k in keys]
    y2 = jax.block_until_ready(date_preprocessing(vecs))
    ref2 = jnp.stack(vecs).astype(jnp.int32)
    assert y2.dtype == jnp.int32 and y2.shape == (B, D)
    assert jnp.array_equal(y2, ref2)

    # Case 3: moderately larger batch that takes the Pallas path via the
    # default threshold (exercises padding + lane-dense slab + grid).
    B3 = 4096
    x3 = jax.random.uniform(jax.random.PRNGKey(1), (B3, D), dtype=jnp.float32) * 6000.0 - 100.0
    y3 = jax.block_until_ready(date_preprocessing(x3))
    assert y3.dtype == jnp.int32 and y3.shape == (B3, D)
    assert jnp.array_equal(y3, x3.astype(jnp.int32))

    print("KERNEL_OK")
</pallas_src>

<mosaic_0001>
module attributes {stable_mosaic.version = 11 : i64} {
  func.func @_cast_to_int_kernel(%arg0: i32, %arg1: memref<8x512xf32, #tpu.memory_space<vmem>>, %arg2: memref<8x512xi32, #tpu.memory_space<vmem>>) attributes {dimension_semantics = [#tpu.dimension_semantics<parallel>], iteration_bounds = array<i64: 1>, scalar_prefetch = 0 : i64, scratch_operands = 0 : i64, tpu.core_type = #tpu.core_type<tc>, window_params = [{transform_indices = @transform_0, window_bounds = array<i64: 8, 512>}, {transform_indices = @transform_1, window_bounds = array<i64: 8, 512>}]} {
    %c0 = arith.constant 0 : index
    %c0_0 = arith.constant 0 : index
    %0 = vector.load %arg1[%c0, %c0_0] : memref<8x512xf32, #tpu.memory_space<vmem>>, vector<8x512xf32>
    %1 = arith.fptosi %0 : vector<8x512xf32> to vector<8x512xi32>
    %c0_1 = arith.constant 0 : index
    %c0_2 = arith.constant 0 : index
    %2 = vector.load %arg2[%c0_1, %c0_2] : memref<8x512xi32, #tpu.memory_space<vmem>>, vector<8x512xi32>
    tpu.vector_store %arg2[%c0_1, %c0_2], %1 {strides = array<i32>} : memref<8x512xi32, #tpu.memory_space<vmem>>, vector<8x512xi32>,
    return
  }
  func.func @transform_0(%arg0: i32) -> (i32, i32) {
    %c0_i32 = arith.constant 0 : i32
    %c0_i32_0 = arith.constant 0 : i32
    return %arg0, %c0_i32 : i32, i32
  }
  func.func @transform_1(%arg0: i32) -> (i32, i32) {
    %c0_i32 = arith.constant 0 : i32
    %c0_i32_0 = arith.constant 0 : i32
    return %arg0, %c0_i32 : i32, i32
  }
}

</mosaic_0001>

<llo_original>
// kernel: tpu_custom_call.1
$region0: #{tpu_custom_call.1}
  #allocation0 [shape = 'u32[]', space=smem, size = 0x4, offset = 0x4, fixed_abs, tag = 'smem constant byte address 0x4 - core index']
  #allocation1 [shape = 'u32[72,128]{1,0:T(1,128)}', space=vmem, size = 0x9000, scoped, tag = 'internal scratch']
  %s0 = inlined_call_operand.hbm [shape: f32[8,512], index: 0, kind: input, shape index: {}]
  %s1 = inlined_call_operand.hbm [shape: s32[8,512], index: 1, kind: output, shape index: {}]
  %s2 = sld [smem:[#allocation0]]
  $region18: #{tpu_custom_call.1} parent=0
    _
  %s4 = ssub.s32 1, %s2
  %s5 = scalar_select 0, %s4, %s2
  $region1: #{tpu_custom_call.1} parent=0
    #allocation2 [shape = 'u8[16384]{0}', space=vmem, size = 0x4000, scoped, tag = 'input window, operand 0, single buffered']
    #allocation3 [shape = 's32[1]{0}', space=sflag, size = 0x4, scoped, tag = 'scoped memory for tpu_custom_call.1']
    #allocation4 [shape = 's32[1]{0}', space=sflag, size = 0x4, scoped, tag = 'scoped memory for tpu_custom_call.1']
    #allocation5 [shape = 'u8[16384]{0}', space=vmem, size = 0x4000, scoped, tag = 'output window, operand 0, single buffered']
    %6 = vsyncpa [#allocation3], 0
    %7 = vsyncpa [#allocation4], 0
    // Predicated region
    $region2: #{tpu_custom_call.1} parent=1 // pred_check
      _
    $region3: #{tpu_custom_call.1} parent=1 // pred_check_branch
      %9 = sbr.rel (0) target = $region5
    $region4: #{tpu_custom_call.1} parent=1 // pred_region
      %11 = vsyncadd [#allocation3], 0
      %s13 = sshll.u32 %s0, 4
      %s14 = int_to_ptr.hbm [resolvable:$true] %s13
      %s15 = sshll.u32 [#allocation2], 4
      %s16 = int_to_ptr.vmem [resolvable:$true] %s15
      %18 = dma.hbm_to_vmem [thread:$0]  %s14, 512, %s16, [#allocation3]
    $region5: #{tpu_custom_call.1} parent=1 // pred_fallthru
      _
    // Predicated region
    $region6: #{tpu_custom_call.1} parent=1 // pred_check
      _
    $region7: #{tpu_custom_call.1} parent=1 // pred_check_branch
      %20 = sbr.rel (0) target = $region9
    $region8: #{tpu_custom_call.1} parent=1 // pred_region
      %22 = dma.done [#allocation3], 512
    $region9: #{tpu_custom_call.1} parent=1 // pred_fallthru
      _
    %v23 = vld [vmem:[#allocation2] sm:$0xff]
    %v24 = vld [vmem:[#allocation2 + $0x8] sm:$0xff]
    %v25 = vld [vmem:[#allocation2 + $0x10] sm:$0xff]
    %v26 = vld [vmem:[#allocation2 + $0x18] sm:$0xff]
    %v27 = vcvt.f32.s32.to.zero.pseudo %v23
    %v28 = vcvt.f32.s32.to.zero.pseudo %v24
    %v29 = vcvt.f32.s32.to.zero.pseudo %v25
    %v30 = vcvt.f32.s32.to.zero.pseudo %v26
    %31 = vst [vmem:[#allocation5] sm:$0xff] %v27
    %32 = vst [vmem:[#allocation5 + $0x8] sm:$0xff] %v28
    %33 = vst [vmem:[#allocation5 + $0x10] sm:$0xff] %v29
    %34 = vst [vmem:[#allocation5 + $0x18] sm:$0xff] %v30
    // Predicated region
    $region10: #{tpu_custom_call.1} parent=1 // pred_check
      _
    $region11: #{tpu_custom_call.1} parent=1 // pred_check_branch
      %36 = sbr.rel (0) target = $region13
    $region12: #{tpu_custom_call.1} parent=1 // pred_region
      %38 = vsyncadd [#allocation4], 0
      %s40 = sshll.u32 [#allocation5], 4
      %s41 = int_to_ptr.vmem [resolvable:$true] %s40
      %s42 = sshll.u32 %s1, 4
      %s43 = int_to_ptr.hbm [resolvable:$true] %s42
      %45 = dma.vmem_to_hbm [thread:$0]  %s41, 512, %s43, [#allocation4]
    $region13: #{tpu_custom_call.1} parent=1 // pred_fallthru
      _
    // Predicated region
    $region14: #{tpu_custom_call.1} parent=1 // pred_check
      _
    $region15: #{tpu_custom_call.1} parent=1 // pred_check_branch
      %47 = sbr.rel (0) target = $region17
    $region16: #{tpu_custom_call.1} parent=1 // pred_region
      %49 = dma.done [#allocation4], 512
    $region17: #{tpu_custom_call.1} parent=1 // pred_fallthru
      _
    %50 = vsyncpa [#allocation3], 1
    %51 = vsyncpa [#allocation4], 1

</llo_original>
